<compile_context>
chip_gen: v6e
topology: v6e:2x2x1
jax: 0.10.0
libtpu: 0.0.40
codegen_flags: <defaults>
</compile_context>

<pallas_src>
import functools

import numpy as np
import jax
import jax.numpy as jnp
from jax import lax
from jax.experimental import pallas as pl
from jax.experimental.pallas import tpu as pltpu

N_QUBITS = 6
DEFAULT_BLOCK_BATCH = 65536  # lanes per grid step (~16 MiB peak VMEM with double buffering)


def quantum_layer_kernel(a_ref, c_ref, o_ref):
    """a_ref: (6,1)  row j holds -0.5 * prod(cos(w_i), i in S_{5-j})  (precomputed).
       c_ref: (6,BT) row i holds cos(2*pi*x_i) for the batch lanes of this block.
       o_ref: (6,BT) row j = P(measured qubit 5-j == 1) = 0.5 + a_j * prod(c_i, i in S_{5-j})."""
    c = c_ref[...]                                                   # (6, BT)
    row = lax.broadcasted_iota(jnp.int32, (N_QUBITS, 1), 0)          # output-row index

    # Output row j <-> measured qubit q = 5-j.  c_i is included in row j iff
    #   (j <= 4 and i <= 5-j)  or  (j == 5 and i >= 1).
    prod = None
    for i in range(N_QUBITS):
        bi = jnp.broadcast_to(c[i:i + 1, :], c.shape)                # sublane broadcast of row i
        if i == 1:
            fi = bi                                                  # qubit 1 is in every subset
        else:
            mask = (row + i <= N_QUBITS - 1) & (row <= N_QUBITS - 2)
            if i >= 1:
                mask = mask | (row == N_QUBITS - 1)
            fi = jnp.where(mask, bi, 1.0)
        prod = fi if prod is None else prod * fi

    # Single lane-dense store; weight constants broadcast along lanes.
    o_ref[...] = 0.5 + a_ref[...] * prod


@functools.partial(jax.jit, static_argnames=("block_batch",))
def quantum_layer_forward(x, weights, *, block_batch=DEFAULT_BLOCK_BATCH):
    """x: [B, F] with F >= N_QUBITS; weights: [N_QUBITS]. Returns [B, N_QUBITS] f32."""
    B = x.shape[0]

    # Fused slice + cast + exact-period range reduction + cos + transpose
    # producing the lane-dense [6, B] slab the kernel consumes (one HBM pass).
    xs = x[:, :N_QUBITS].astype(jnp.float32)
    xs = xs - jnp.round(xs)                                 # cos(2*pi*x) robust for large |x|
    cq = jnp.transpose(jnp.cos((2.0 * jnp.pi) * xs))        # [6, B]

    # Per-output-row weight constants: a[j] = -0.5 * prod(cos(w_i), i in S_{5-j}).
    cw = jnp.cos(weights.astype(jnp.float32))
    cp = jnp.cumprod(cw)
    cw_rows = jnp.concatenate([cp[N_QUBITS - 1:0:-1],       # S_5 ... S_1  (prefix products)
                               jnp.prod(cw[1:])[None]])     # S_0 = {1..5}
    a = (-0.5 * cw_rows).reshape(N_QUBITS, 1)

    # Block-size selection:
    #  * tiny batches: one full-extent block (legal for any B),
    #  * otherwise: multiple-of-128 blocks, at least 2 of them (v7x dual-TC),
    #    capped by block_batch; ragged last block handled by Pallas (no jnp.pad).
    if B <= block_batch and B <= 256:
        bt = B
    else:
        bt = min(block_batch, -(-B // 2))                   # >= 2 blocks
        bt = ((bt + 127) // 128) * 128                      # lane-aligned
        if bt >= B:
            bt = B
    grid = (pl.cdiv(B, bt),)

    out_t = pl.pallas_call(
        quantum_layer_kernel,
        out_shape=jax.ShapeDtypeStruct((N_QUBITS, B), jnp.float32),
        grid=grid,
        in_specs=[
            pl.BlockSpec((N_QUBITS, 1), lambda i: (0, 0)),   # weight constants, replicated
            pl.BlockSpec((N_QUBITS, bt), lambda i: (0, i)),  # cos(2*pi*x) block
        ],
        out_specs=pl.BlockSpec((N_QUBITS, bt), lambda i: (0, i)),
        compiler_params=pltpu.CompilerParams(
            dimension_semantics=("parallel",),               # shards blocks across v7x TCs
            vmem_limit_bytes=32 * 1024 * 1024),
    )(a, cq)

    # Back to the module's [B, N_QUBITS] convention (layout plumbing only).
    return jnp.transpose(out_t)


def ref_forward_numpy(x, w):
    """Exact statevector reference mirroring the qiskit circuit + bit ordering."""
    x = np.asarray(x, dtype=np.float64)
    w = np.asarray(w, dtype=np.float64)
    B = x.shape[0]
    nq = N_QUBITS
    out = np.zeros((B, nq), dtype=np.float64)
    for s in range(B):
        theta = x[s, :nq] * 2.0 * np.pi
        qstates = []
        for i in range(nq):
            ry0, ry1 = np.cos(theta[i] / 2), np.sin(theta[i] / 2)
            cwi, swi = np.cos(w[i] / 2), np.sin(w[i] / 2)
            aamp = cwi * ry0 - 1j * swi * ry1
            bamp = -1j * swi * ry0 + cwi * ry1
            qstates.append(np.array([aamp, bamp]))
        # full product-state amplitudes, little-endian basis index (bit i = qubit i)
        amps = np.zeros(2 ** nq, dtype=complex)
        for z in range(2 ** nq):
            amp = 1.0 + 0j
            for i in range(nq):
                amp *= qstates[i][(z >> i) & 1]
            amps[z] = amp
        # CX ring: cx(c, (c+1) % nq), applied sequentially (basis permutation)
        for c in range(nq):
            t = (c + 1) % nq
            new = np.zeros_like(amps)
            for z in range(2 ** nq):
                z2 = z ^ (1 << t) if (z >> c) & 1 else z
                new[z2] = amps[z]
            amps = new
        probs_z = np.abs(amps) ** 2
        # feature j = P(qubit nq-1-j == 1)   (qiskit bitstring ordering)
        for j in range(nq):
            q = nq - 1 - j
            out[s, j] = sum(probs_z[z] for z in range(2 ** nq) if (z >> q) & 1)
    return out.astype(np.float32)


if __name__ == "__main__":
    key = jax.random.PRNGKey(0)
    kx, kw, kx2 = jax.random.split(key, 3)

    # Small test: batch=8, features=8 (>= n_qubits), single full-extent block path.
    B, F = 8, 8
    x = jax.random.uniform(kx, (B, F), dtype=jnp.float32)
    weights = jax.random.uniform(kw, (N_QUBITS,), dtype=jnp.float32) * (2.0 * np.pi)

    out = quantum_layer_forward(x, weights)
    out = jax.block_until_ready(out)
    ref = ref_forward_numpy(np.array(x), np.array(weights))
    np.testing.assert_allclose(np.array(out), ref, atol=1e-4, rtol=1e-4)

    # Second test: B=200 with block_batch=128 -> 2-block grid with a ragged last
    # block (exercises the no-pad cdiv path and the parallel grid).
    B2 = 200
    x2 = jax.random.uniform(kx2, (B2, F), dtype=jnp.float32)
    out2 = quantum_layer_forward(x2, weights, block_batch=128)
    out2 = jax.block_until_ready(out2)
    ref2 = ref_forward_numpy(np.array(x2), np.array(weights))
    np.testing.assert_allclose(np.array(out2), ref2, atol=1e-4, rtol=1e-4)

    print("KERNEL_OK")
</pallas_src>

<mosaic_0001>
module attributes {stable_mosaic.version = 11 : i64} {
  func.func @quantum_layer_kernel(%arg0: i32, %arg1: memref<6x1xf32, #tpu.memory_space<vmem>>, %arg2: memref<6x8xf32, #tpu.memory_space<vmem>>, %arg3: memref<6x8xf32, #tpu.memory_space<vmem>>) attributes {dimension_semantics = [#tpu.dimension_semantics<parallel>], iteration_bounds = array<i64: 1>, scalar_prefetch = 0 : i64, scratch_operands = 0 : i64, tpu.core_type = #tpu.core_type<tc>, window_params = [{pipeline_mode = #tpu.pipeline_mode<synchronous>, transform_indices = @transform_0, window_bounds = array<i64: 6, 1>}, {transform_indices = @transform_1, window_bounds = array<i64: 6, 8>}, {transform_indices = @transform_2, window_bounds = array<i64: 6, 8>}]} {
    %c0 = arith.constant 0 : index
    %c0_0 = arith.constant 0 : index
    %0 = vector.load %arg2[%c0, %c0_0] : memref<6x8xf32, #tpu.memory_space<vmem>>, vector<6x8xf32>
    %1 = tpu.iota {dimensions = array<i32: 0>} : vector<6x1xi32>
    %2 = vector.extract_strided_slice %0 {offsets = [0, 0], sizes = [1, 8], strides = [1, 1]} : vector<6x8xf32> to vector<1x8xf32>
    %3 = vector.shape_cast %2 : vector<1x8xf32> to vector<1x8xf32>
    %4 = vector.broadcast %3 : vector<1x8xf32> to vector<6x8xf32>
    %c0_i32 = arith.constant 0 : i32
    %5 = vector.broadcast %c0_i32 : i32 to vector<6x1xi32>
    %6 = arith.addi %1, %5 : vector<6x1xi32>
    %c5_i32 = arith.constant 5 : i32
    %7 = vector.broadcast %c5_i32 : i32 to vector<6x1xi32>
    %8 = arith.cmpi sle, %6, %7 : vector<6x1xi32>
    %c4_i32 = arith.constant 4 : i32
    %9 = vector.broadcast %c4_i32 : i32 to vector<6x1xi32>
    %10 = arith.cmpi sle, %1, %9 : vector<6x1xi32>
    %11 = arith.andi %8, %10 : vector<6x1xi1>
    %cst = arith.constant 1.000000e+00 : f32
    %12 = vector.shape_cast %11 : vector<6x1xi1> to vector<6x1xi1>
    %13 = vector.broadcast %12 : vector<6x1xi1> to vector<6x8xi1>
    %14 = vector.broadcast %cst : f32 to vector<6x8xf32>
    %15 = arith.select %13, %4, %14 : vector<6x8xi1>, vector<6x8xf32>
    %16 = vector.extract_strided_slice %0 {offsets = [1, 0], sizes = [1, 8], strides = [1, 1]} : vector<6x8xf32> to vector<1x8xf32>
    %17 = vector.shape_cast %16 : vector<1x8xf32> to vector<1x8xf32>
    %18 = vector.broadcast %17 : vector<1x8xf32> to vector<6x8xf32>
    %19 = arith.mulf %15, %18 : vector<6x8xf32>
    %20 = vector.extract_strided_slice %0 {offsets = [2, 0], sizes = [1, 8], strides = [1, 1]} : vector<6x8xf32> to vector<1x8xf32>
    %21 = vector.shape_cast %20 : vector<1x8xf32> to vector<1x8xf32>
    %22 = vector.broadcast %21 : vector<1x8xf32> to vector<6x8xf32>
    %c2_i32 = arith.constant 2 : i32
    %23 = vector.broadcast %c2_i32 : i32 to vector<6x1xi32>
    %24 = arith.addi %1, %23 : vector<6x1xi32>
    %c5_i32_1 = arith.constant 5 : i32
    %25 = vector.broadcast %c5_i32_1 : i32 to vector<6x1xi32>
    %26 = arith.cmpi sle, %24, %25 : vector<6x1xi32>
    %c4_i32_2 = arith.constant 4 : i32
    %27 = vector.broadcast %c4_i32_2 : i32 to vector<6x1xi32>
    %28 = arith.cmpi sle, %1, %27 : vector<6x1xi32>
    %29 = arith.andi %26, %28 : vector<6x1xi1>
    %c5_i32_3 = arith.constant 5 : i32
    %30 = vector.broadcast %c5_i32_3 : i32 to vector<6x1xi32>
    %31 = arith.cmpi eq, %1, %30 : vector<6x1xi32>
    %32 = arith.ori %29, %31 : vector<6x1xi1>
    %cst_4 = arith.constant 1.000000e+00 : f32
    %33 = vector.shape_cast %32 : vector<6x1xi1> to vector<6x1xi1>
    %34 = vector.broadcast %33 : vector<6x1xi1> to vector<6x8xi1>
    %35 = vector.broadcast %cst_4 : f32 to vector<6x8xf32>
    %36 = arith.select %34, %22, %35 : vector<6x8xi1>, vector<6x8xf32>
    %37 = arith.mulf %19, %36 : vector<6x8xf32>
    %38 = vector.extract_strided_slice %0 {offsets = [3, 0], sizes = [1, 8], strides = [1, 1]} : vector<6x8xf32> to vector<1x8xf32>
    %39 = vector.shape_cast %38 : vector<1x8xf32> to vector<1x8xf32>
    %40 = vector.broadcast %39 : vector<1x8xf32> to vector<6x8xf32>
    %c3_i32 = arith.constant 3 : i32
    %41 = vector.broadcast %c3_i32 : i32 to vector<6x1xi32>
    %42 = arith.addi %1, %41 : vector<6x1xi32>
    %c5_i32_5 = arith.constant 5 : i32
    %43 = vector.broadcast %c5_i32_5 : i32 to vector<6x1xi32>
    %44 = arith.cmpi sle, %42, %43 : vector<6x1xi32>
    %c4_i32_6 = arith.constant 4 : i32
    %45 = vector.broadcast %c4_i32_6 : i32 to vector<6x1xi32>
    %46 = arith.cmpi sle, %1, %45 : vector<6x1xi32>
    %47 = arith.andi %44, %46 : vector<6x1xi1>
    %c5_i32_7 = arith.constant 5 : i32
    %48 = vector.broadcast %c5_i32_7 : i32 to vector<6x1xi32>
    %49 = arith.cmpi eq, %1, %48 : vector<6x1xi32>
    %50 = arith.ori %47, %49 : vector<6x1xi1>
    %cst_8 = arith.constant 1.000000e+00 : f32
    %51 = vector.shape_cast %50 : vector<6x1xi1> to vector<6x1xi1>
    %52 = vector.broadcast %51 : vector<6x1xi1> to vector<6x8xi1>
    %53 = vector.broadcast %cst_8 : f32 to vector<6x8xf32>
    %54 = arith.select %52, %40, %53 : vector<6x8xi1>, vector<6x8xf32>
    %55 = arith.mulf %37, %54 : vector<6x8xf32>
    %56 = vector.extract_strided_slice %0 {offsets = [4, 0], sizes = [1, 8], strides = [1, 1]} : vector<6x8xf32> to vector<1x8xf32>
    %57 = vector.shape_cast %56 : vector<1x8xf32> to vector<1x8xf32>
    %58 = vector.broadcast %57 : vector<1x8xf32> to vector<6x8xf32>
    %c4_i32_9 = arith.constant 4 : i32
    %59 = vector.broadcast %c4_i32_9 : i32 to vector<6x1xi32>
    %60 = arith.addi %1, %59 : vector<6x1xi32>
    %c5_i32_10 = arith.constant 5 : i32
    %61 = vector.broadcast %c5_i32_10 : i32 to vector<6x1xi32>
    %62 = arith.cmpi sle, %60, %61 : vector<6x1xi32>
    %c4_i32_11 = arith.constant 4 : i32
    %63 = vector.broadcast %c4_i32_11 : i32 to vector<6x1xi32>
    %64 = arith.cmpi sle, %1, %63 : vector<6x1xi32>
    %65 = arith.andi %62, %64 : vector<6x1xi1>
    %c5_i32_12 = arith.constant 5 : i32
    %66 = vector.broadcast %c5_i32_12 : i32 to vector<6x1xi32>
    %67 = arith.cmpi eq, %1, %66 : vector<6x1xi32>
    %68 = arith.ori %65, %67 : vector<6x1xi1>
    %cst_13 = arith.constant 1.000000e+00 : f32
    %69 = vector.shape_cast %68 : vector<6x1xi1> to vector<6x1xi1>
    %70 = vector.broadcast %69 : vector<6x1xi1> to vector<6x8xi1>
    %71 = vector.broadcast %cst_13 : f32 to vector<6x8xf32>
    %72 = arith.select %70, %58, %71 : vector<6x8xi1>, vector<6x8xf32>
    %73 = arith.mulf %55, %72 : vector<6x8xf32>
    %74 = vector.extract_strided_slice %0 {offsets = [5, 0], sizes = [1, 8], strides = [1, 1]} : vector<6x8xf32> to vector<1x8xf32>
    %75 = vector.shape_cast %74 : vector<1x8xf32> to vector<1x8xf32>
    %76 = vector.broadcast %75 : vector<1x8xf32> to vector<6x8xf32>
    %c5_i32_14 = arith.constant 5 : i32
    %77 = vector.broadcast %c5_i32_14 : i32 to vector<6x1xi32>
    %78 = arith.addi %1, %77 : vector<6x1xi32>
    %c5_i32_15 = arith.constant 5 : i32
    %79 = vector.broadcast %c5_i32_15 : i32 to vector<6x1xi32>
    %80 = arith.cmpi sle, %78, %79 : vector<6x1xi32>
    %c4_i32_16 = arith.constant 4 : i32
    %81 = vector.broadcast %c4_i32_16 : i32 to vector<6x1xi32>
    %82 = arith.cmpi sle, %1, %81 : vector<6x1xi32>
    %83 = arith.andi %80, %82 : vector<6x1xi1>
    %c5_i32_17 = arith.constant 5 : i32
    %84 = vector.broadcast %c5_i32_17 : i32 to vector<6x1xi32>
    %85 = arith.cmpi eq, %1, %84 : vector<6x1xi32>
    %86 = arith.ori %83, %85 : vector<6x1xi1>
    %cst_18 = arith.constant 1.000000e+00 : f32
    %87 = vector.shape_cast %86 : vector<6x1xi1> to vector<6x1xi1>
    %88 = vector.broadcast %87 : vector<6x1xi1> to vector<6x8xi1>
    %89 = vector.broadcast %cst_18 : f32 to vector<6x8xf32>
    %90 = arith.select %88, %76, %89 : vector<6x8xi1>, vector<6x8xf32>
    %91 = arith.mulf %73, %90 : vector<6x8xf32>
    %c0_19 = arith.constant 0 : index
    %c0_20 = arith.constant 0 : index
    %92 = vector.load %arg1[%c0_19, %c0_20] : memref<6x1xf32, #tpu.memory_space<vmem>>, vector<6x1xf32>
    %93 = vector.broadcast %92 : vector<6x1xf32> to vector<6x8xf32>
    %94 = arith.mulf %93, %91 : vector<6x8xf32>
    %cst_21 = arith.constant 5.000000e-01 : f32
    %95 = vector.broadcast %cst_21 : f32 to vector<6x8xf32>
    %96 = arith.addf %95, %94 : vector<6x8xf32>
    %c0_22 = arith.constant 0 : index
    %c0_23 = arith.constant 0 : index
    %97 = vector.load %arg3[%c0_22, %c0_23] : memref<6x8xf32, #tpu.memory_space<vmem>>, vector<6x8xf32>
    tpu.vector_store %arg3[%c0_22, %c0_23], %96 {strides = array<i32>} : memref<6x8xf32, #tpu.memory_space<vmem>>, vector<6x8xf32>,
    return
  }
  func.func @transform_0(%arg0: i32) -> (i32, i32) {
    %c0_i32 = arith.constant 0 : i32
    %c0_i32_0 = arith.constant 0 : i32
    %c0_i32_1 = arith.constant 0 : i32
    return %c0_i32, %c0_i32_0 : i32, i32
  }
  func.func @transform_1(%arg0: i32) -> (i32, i32) {
    %c0_i32 = arith.constant 0 : i32
    %c0_i32_0 = arith.constant 0 : i32
    return %c0_i32, %arg0 : i32, i32
  }
  func.func @transform_2(%arg0: i32) -> (i32, i32) {
    %c0_i32 = arith.constant 0 : i32
    %c0_i32_0 = arith.constant 0 : i32
    return %c0_i32, %arg0 : i32, i32
  }
}

</mosaic_0001>

<llo_original>
// kernel: cos.3
$region0: #{cos.3}
  #allocation0 [shape = 's32[1]{0}', space=sflag, size = 0x4, scoped, tag = 'scoped memory for cos.3']
  %s0 = inlined_call_operand.vmem [shape: f32[6], index: 0, kind: input, shape index: {}]
  %s1 = inlined_call_operand.vmem [shape: f32[6], index: 1, kind: output, shape index: {}]
  %v2 = vld [vmem:[%s0] sm:$0x1]
  %v3 = vand.u32 2147483647, %v2
  %vm4 = vcmp.le.f32.partialorder %v3, 0.7853982
  %vm5 = vcmp.lt.s32.totalorder %v2, 0
  %v6 = vand.u32 %v2, 2139095040
  %v7 = vshrl.u32 %v6, 23
  %v8 = vsub.s32 %v7, 127
  %v9 = vand.u32 2147483647, %v2
  %v10 = vand.u32 %v9, 8388607
  %v11 = vor.u32 %v10, 8388608
  %v12 = vsub.s32 0, %v11
  %v13 = vadd.s32 %v8, 1
  %vm14 = vcmp.gt.s32.totalorder %v13, 0
  %v15 = vsel %vm14, %v13, 0
  %v16 = vshrl.u32 %v15, 5
  %v17 = vand.u32 %v15, 31
  %v18 = vsub.s32 32, %v17
  %v19 = vshrl.u32 683565275, %v18
  %v20 = vshll.u32 683565275, %v17
  %v21 = vshrl.u32 2475754826, %v18
  %v22 = vor.u32 %v20, %v21
  %v23 = vshll.u32 2475754826, %v17
  %v24 = vshrl.u32 2131351028, %v18
  %v25 = vor.u32 %v23, %v24
  %v26 = vshll.u32 2131351028, %v17
  %v27 = vshrl.u32 2102212464, %v18
  %v28 = vor.u32 %v26, %v27
  %v29 = vshll.u32 2102212464, %v17
  %v30 = vshrl.u32 920167782, %v18
  %v31 = vor.u32 %v29, %v30
  %v32 = vshll.u32 920167782, %v17
  %v33 = vshrl.u32 1326507024, %v18
  %v34 = vor.u32 %v32, %v33
  %vm35 = vcmp.lt.s32.totalorder %v16, 1
  %vm36 = vcmp.lt.s32.totalorder %v16, 2
  %vm37 = vcmp.lt.s32.totalorder %v16, 3
  %vm38 = vcmp.lt.s32.totalorder %v16, 4
  %v39 = vsel %vm35, %v19, %v22
  %v40 = vsel %vm38, %v28, 2102212464
  %v41 = vsel %vm37, %v25, %v40
  %v42 = vsel %vm36, %v39, %v41
  %v43 = vsel %vm35, %v22, %v25
  %v44 = vsel %vm38, %v31, 920167782
  %v45 = vsel %vm37, %v28, %v44
  %v46 = vsel %vm36, %v43, %v45
  %v47 = vsel %vm35, %v25, %v28
  %v48 = vsel %vm38, %v34, 1326507024
  %v49 = vsel %vm37, %v31, %v48
  %v50 = vsel %vm36, %v47, %v49
  %v51 = vshll.u32 %v11, 8
  %v52 = vmul.u32.u64.compose %v51, %v50
  %v53 = vextract.low.u32 %v52
  %v54 = vextract.high.u32 %v52
  %v55 = vmul.u32.u64.compose %v51, %v46
  %v56 = vextract.low.u32 %v55
  %v57 = vextract.high.u32 %v55
  %v58 = vmul.u32 %v51, %v42
  %v59 = vadd.s32 %v54, %v56
  %vm60 = vc.u32 %v54, %v56
  %v61 = vadd.s32 %v57, 1
  %v62 = vsel %vm60, %v61, %v57
  %v63 = vadd.s32 %v58, %v62
  %v64 = vadd.s32 %v63, 536870912
  %v65 = vshrl.u32 %v64, 30
  %v66 = vshll.u32 %v65, 30
  %v67 = vsub.s32 %v63, %v66
  %vm68 = vcmp.lt.s32.totalorder %v67, 0
  %v69 = vsub.s32 0, %v67
  %v70 = vsel %vm68, %v69, %v67
  %v71 = vclz %v70
  %v72 = vsub.s32 %v71, 2
  %vm73 = vcmp.gt.s32.totalorder 0, %v72
  %v74 = vsel %vm73, 0, %v72
  %v75 = vsub.s32 32, %v74
  %v76 = vshll.u32 %v67, %v74
  %v77 = vshrl.u32 %v59, %v75
  %v78 = vor.u32 %v76, %v77
  %v79 = vsub.s32 4294967266, %v74
  %v80 = vadd.s32 %v79, 127
  %v81 = vshll.u32 %v80, 23
  %v82 = vor.u32 4788187, %v81
  %v83 = vand.u32 2147483647, %v82
  %v85 = vcvt.s32.f32 %v78
  %v86 = vmul.f32 %v85, %v83
  %v87 = vxor.u32 %v86, 2147483648
  %v88 = vsel %vm5, %v87, %v86
  %v89 = vsub.s32 4, %v65
  %v90 = vsel %vm5, %v89, %v65
  %v91 = vsel %vm4, %v2, %v88
  %v92 = vsel %vm4, 0, %v90
  %v93 = vcosq.f32.pop %v91
  %v94 = vsinq.f32.pop %v91
  %vm95 = vweird.f32 %v2
  %v96 = vand.u32 %v92, 3
  %vm97 = vcmp.lt.s32.totalorder %v96, 2
  %vm98 = vcmp.eq.s32.totalorder %v96, 0
  %v99 = vxor.u32 %v94, 2147483648
  %v100 = vsel %vm98, %v93, %v99
  %vm101 = vcmp.eq.s32.totalorder %v96, 2
  %v102 = vxor.u32 %v93, 2147483648
  %v103 = vsel %vm101, %v102, %v94
  %v104 = vsel %vm97, %v100, %v103
  %v105 = vsel %vm95, nan, %v104
  %106 = vst [vmem:[%s1] sm:$0x1] %v105

// kernel: quantum_layer_forward.1
$region0: #{quantum_layer_forward.1}
  #allocation0 [shape = 'u32[]', space=smem, size = 0x4, offset = 0x4, fixed_abs, tag = 'smem constant byte address 0x4 - core index']
  #allocation1 [shape = 'u32[144,128]{1,0:T(1,128)}', space=vmem, size = 0x12000, scoped, tag = 'internal scratch']
  %s0 = inlined_call_operand.vmem [shape: f32[6,1], index: 0, kind: input, shape index: {}]
  %s1 = inlined_call_operand.vmem [shape: f32[6,8], index: 1, kind: input, shape index: {}]
  %s2 = inlined_call_operand.vmem [shape: f32[6,8], index: 2, kind: output, shape index: {}]
  %s3 = sld [smem:[#allocation0]]
  $region18: #{quantum_layer_forward.1} parent=0
    _
  %s5 = ssub.s32 1, %s3
  %s6 = scalar_select 0, %s5, %s3
  // Predicated region
  $region2: #{quantum_layer_forward.1} parent=0 // pred_check
    _
  $region3: #{quantum_layer_forward.1} parent=0 // pred_check_branch
    %8 = sbr.rel (0) target = $region5
  $region4: #{quantum_layer_forward.1} parent=0 // pred_region
    _
  $region5: #{quantum_layer_forward.1} parent=0 // pred_fallthru
    _
  // Predicated region
  $region6: #{quantum_layer_forward.1} parent=0 // pred_check
    _
  $region7: #{quantum_layer_forward.1} parent=0 // pred_check_branch
    %10 = sbr.rel (0) target = $region9
  $region8: #{quantum_layer_forward.1} parent=0 // pred_region
    _
  $region9: #{quantum_layer_forward.1} parent=0 // pred_fallthru
    _
  %v11 = vld [vmem:[%s1] sm:$0x3f]
  %v12 = vlaneseq
  %v13 = vshrl.u32 %v12, 7
  %v14 = vlaneseq
  %v15 = vshrl.u32 %v14, 7
  %v16 = vsub.s32 0, %v15
  %v17 = vrot.slane %v11, %v16
  %vm18 = vcmp.le.s32.totalorder %v13, 5
  %vm19 = vcmp.le.s32.totalorder %v13, 4
  %vm20 = vmand %vm18, %vm19
  %v21 = vsel %vm20, 1, 0
  %vm22 = vcmp.eq.s32.totalorder %v21, 1
  %v23 = vsel %vm22, %v17, 1.0
  %v24 = vlaneseq
  %v25 = vshrl.u32 %v24, 7
  %v26 = vsub.s32 1, %v25
  %v27 = vrot.slane %v11, %v26
  %v28 = vmul.f32 %v23, %v27
  %v29 = vlaneseq
  %v30 = vshrl.u32 %v29, 7
  %v31 = vsub.s32 2, %v30
  %v32 = vrot.slane %v11, %v31
  %v33 = vadd.s32 %v13, 2
  %vm34 = vcmp.le.s32.totalorder %v33, 5
  %vm35 = vmand %vm34, %vm19
  %vm36 = vcmp.eq.s32.totalorder %v13, 5
  %vm37 = vmor %vm35, %vm36
  %v38 = vsel %vm37, 1, 0
  %vm39 = vcmp.eq.s32.totalorder %v38, 1
  %v40 = vsel %vm39, %v32, 1.0
  %v41 = vmul.f32 %v28, %v40
  %v42 = vlaneseq
  %v43 = vshrl.u32 %v42, 7
  %v44 = vsub.s32 3, %v43
  %v45 = vrot.slane %v11, %v44
  %v46 = vadd.s32 %v13, 3
  %vm47 = vcmp.le.s32.totalorder %v46, 5
  %vm48 = vmand %vm47, %vm19
  %vm49 = vmor %vm48, %vm36
  %v50 = vsel %vm49, 1, 0
  %vm51 = vcmp.eq.s32.totalorder %v50, 1
  %v52 = vsel %vm51, %v45, 1.0
  %v53 = vmul.f32 %v41, %v52
  %v54 = vlaneseq
  %v55 = vshrl.u32 %v54, 7
  %v56 = vsub.s32 4, %v55
  %v57 = vrot.slane %v11, %v56
  %v58 = vadd.s32 %v13, 4
  %vm59 = vcmp.le.s32.totalorder %v58, 5
  %vm60 = vmand %vm59, %vm19
  %vm61 = vmor %vm60, %vm36
  %v62 = vsel %vm61, 1, 0
  %vm63 = vcmp.eq.s32.totalorder %v62, 1
  %v64 = vsel %vm63, %v57, 1.0
  %v65 = vmul.f32 %v53, %v64
  %v66 = vlaneseq
  %v67 = vshrl.u32 %v66, 7
  %v68 = vsub.s32 5, %v67
  %v69 = vrot.slane %v11, %v68
  %v70 = vadd.s32 %v13, 5
  %vm71 = vcmp.le.s32.totalorder %v70, 5
  %vm72 = vmand %vm71, %vm19
  %vm73 = vmor %vm72, %vm36
  %v74 = vsel %vm73, 1, 0
  %vm75 = vcmp.eq.s32.totalorder %v74, 1
  %v76 = vsel %vm75, %v69, 1.0
  %v77 = vmul.f32 %v65, %v76
  %v78 = vld [vmem:[%s0] sm:$0x3f]
  %80 = vset.pattern.permute.xlu0 0
  %81 = vperm.xlu0 %80, %v78
  %v82 = vpop.permute.xlu0 %81
  %v84 = vmul.f32 %v82, %v77
  %v85 = vadd.f32 %v84, 0.5
  %vm86 = vcmask 62464
  %87 = vst.msk [vmem:[%s2] sm:$0x3f] %vm86, %v85
  // Predicated region
  $region10: #{quantum_layer_forward.1} parent=0 // pred_check
    _
  $region11: #{quantum_layer_forward.1} parent=0 // pred_check_branch
    %89 = sbr.rel (0) target = $region13
  $region12: #{quantum_layer_forward.1} parent=0 // pred_region
    _
  $region13: #{quantum_layer_forward.1} parent=0 // pred_fallthru
    _
  // Predicated region
  $region14: #{quantum_layer_forward.1} parent=0 // pred_check
    _
  $region15: #{quantum_layer_forward.1} parent=0 // pred_check_branch
    %91 = sbr.rel (0) target = $region17
  $region16: #{quantum_layer_forward.1} parent=0 // pred_region
    _
  $region17: #{quantum_layer_forward.1} parent=0 // pred_fallthru
    _

</llo_original>
